<compile_context>
chip_gen: v7x
topology: tpu7x:2x2x1
jax: 0.10.0
libtpu: 0.0.40
codegen_flags: <defaults>
</compile_context>

<pallas_src>
import functools
import math

import jax
import jax.numpy as jnp
from jax.experimental import pallas as pl
from jax.experimental.pallas import tpu as pltpu


# Abramowitz & Stegun 4.4.46: arccos(t) = sqrt(1-t) * P7(t) on [0, 1],
# |error| <= ~2e-8 rad.  Extended to [-1, 0) via arccos(x) = pi - arccos(-x).
_ACOS_COEFFS = (1.5707963050, -0.2145988016, 0.0889789874, -0.0501743046,
                0.0308918810, -0.0170881256, 0.0066700901, -0.0012624911)


def _acos(x):
    """arccos on [-1, 1] using only mul/add/sqrt/select (pure VPU work)."""
    t = jnp.abs(x)
    p = jnp.float32(_ACOS_COEFFS[-1])
    for c in _ACOS_COEFFS[-2::-1]:
        p = p * t + jnp.float32(c)
    acos_pos = jnp.sqrt(jnp.maximum(1.0 - t, 0.0)) * p
    return jnp.where(x >= 0.0, acos_pos, jnp.float32(math.pi) - acos_pos)


def _cones_kernel(sc_ref, out_ref):
    """Per-edge hyperbolic-cone score; edge axis packed (sublane rows, lanes).

    sc_ref  : (4, TR, L) f32  rows = [a0n.a1n, r_parent, r_child, parent_aperture]
    out_ref : (TR, L)    f32  (parent_aperture - min_parent_rotation).clamp_max(0)
    """
    # Slice the ref row by row (no monolithic (4, TR, L) value held in vregs).
    dot_a = sc_ref[0]
    r0 = sc_ref[1]
    r1 = sc_ref[2]
    ap = sc_ref[3]

    r0sq = r0 * r0
    r1sq = r1 * r1
    dot = r0 * r1 * dot_a                               # v_parent . v_child
    # ||v0 - v1||^2 = r0^2 + r1^2 - 2 v0.v1 (angles are unit vectors).  The
    # max(., 0) only guards fp-noise-negative arguments that would NaN here
    # while the reference's explicit difference norm stays finite.
    dist = jnp.sqrt(jnp.maximum(r0sq + r1sq - 2.0 * dot, 0.0))

    denom = r0 * dist * jnp.sqrt(1.0 + r0sq * r1sq - 2.0 * dot) + 1e-22
    num = dot * (1.0 + r0sq) - r0sq * (1.0 + r1sq)
    # EUP reciprocal + one Newton-Raphson step ~ full f32 precision, but
    # cheaper than the full division expansion on the VALU.
    inv = pl.reciprocal(denom, approx=True)
    inv = inv * (2.0 - denom * inv)
    cos_rot = jnp.clip(num * inv, -1.0, 1.0)
    rot = _acos(cos_rot)

    out_ref[...] = jnp.minimum(ap - rot, 0.0)


def hyperbolic_cones_forward(idxs, angles_table, radii_raw_table, *,
                             cone_aperture_scale, eps_bound,
                             lanes=1024, block_rows=8):
    """idxs: int array of shape (..., 2); returns scores of shape (...)."""
    lead = idxs.shape[:-1]
    flat = idxs.reshape(-1, 2).astype(jnp.int32)
    B = flat.shape[0]
    K = float(cone_aperture_scale)
    eps = float(eps_bound)

    # ---- per-entity precomputation (depends only on the tables) ----
    ang = angles_table.astype(jnp.float32)
    ang_n = ang / jnp.maximum(
        jnp.linalg.norm(ang, axis=-1, keepdims=True), 1e-12)          # (E, D)
    # BoundedTemp forward: r = eps + (1 - 2*eps) * sigmoid(raw)  in (eps, 1-eps)
    r = eps + (1.0 - 2.0 * eps) * jax.nn.sigmoid(
        radii_raw_table.astype(jnp.float32))                          # (E,)
    # Same (unclipped) expression as the reference module.
    aperture = jnp.arcsin(K * (1.0 - r * r) / r)                      # (E,)

    p_idx = flat[:, 0]
    c_idx = flat[:, 1]

    # ---- per-edge: fused gather + angle dot in plain XLA ----
    # Only 16 B/edge of scalars reach the Pallas kernel (no (2D,B) slab, no
    # wrapper-side transpose materialization).
    dot_a = jnp.sum(ang_n[p_idx] * ang_n[c_idx], axis=-1)             # (B,)
    scal = jnp.stack([dot_a, r[p_idx], r[c_idx], aperture[p_idx]], axis=0)

    # ---- pack the edge axis onto (sublane rows, lanes) ----
    lanes = min(int(lanes), pl.cdiv(B, 128) * 128)
    lanes = max(128, (lanes // 128) * 128)
    block_rows = max(8, (int(block_rows) // 8) * 8)
    rows = pl.cdiv(B, lanes)
    if rows <= block_rows:
        tr = rows                         # one full-array block (tiny inputs)
    else:
        tr = block_rows                   # 8 x 1024 = 8192 edges / grid step
        rows = pl.cdiv(rows, tr) * tr     # -> grid >= 2 for large B (v7x TCs)
    Bp = rows * lanes
    scal = jnp.pad(scal, ((0, 0), (0, Bp - B))).reshape(4, rows, lanes)

    out = pl.pallas_call(
        _cones_kernel,
        out_shape=jax.ShapeDtypeStruct((rows, lanes), jnp.float32),
        grid=(rows // tr,),
        in_specs=[pl.BlockSpec((4, tr, lanes), lambda i: (0, i, 0))],
        out_specs=pl.BlockSpec((tr, lanes), lambda i: (i, 0)),
        compiler_params=pltpu.CompilerParams(
            dimension_semantics=("parallel",),
            # Blocks are tiny (<1 MiB double-buffered); set explicitly anyway
            # so v5e's 16 MiB default never throttles scaled-up tiles.
            vmem_limit_bytes=32 * 1024 * 1024),
    )(scal)

    return out.reshape(Bp)[:B].reshape(lead)


def init_params(key, num_entity, dim, relative_cone_aperture_scale=1.0,
                eps_bound=0.1):
    """Deterministic parameter init mirroring the module __init__."""
    k_ang, k_rad = jax.random.split(key)
    # torch.nn.Embedding default init: N(0, 1)
    angles = jax.random.normal(k_ang, (num_entity, dim), dtype=jnp.float32)
    initial_radius_range = 0.9 * (1.0 - 2.0 * eps_bound)
    initial_radius = 0.5 + initial_radius_range * (
        jax.random.uniform(k_rad, (num_entity,), dtype=jnp.float32) - 0.5)
    # BoundedTemp stores logit((init - lo)/(hi - lo)); forward applies
    # lo + (hi - lo) * sigmoid(raw), mapping raw back exactly to initial_radius.
    p = (initial_radius - eps_bound) / (1.0 - 2.0 * eps_bound)
    radii_raw = jnp.log(p) - jnp.log1p(-p)
    K = relative_cone_aperture_scale * eps_bound / (1.0 - eps_bound ** 2)
    return angles, radii_raw, K


def _reference(idxs, angles_table, radii_raw_table, K, eps):
    """Pure-JAX transliteration of the PyTorch forward, for a sanity check."""
    a = angles_table[idxs]                                          # (...,2,D)
    a = a / jnp.maximum(jnp.linalg.norm(a, axis=-1, keepdims=True), 1e-12)
    r = eps + (1.0 - 2.0 * eps) * jax.nn.sigmoid(radii_raw_table[idxs])
    v = r[..., None] * a
    rsq = r * r
    dot = jnp.sum(v[..., 0, :] * v[..., 1, :], axis=-1)
    dist = jnp.linalg.norm(v[..., 0, :] - v[..., 1, :], axis=-1)
    ap = jnp.arcsin(K * (1.0 - rsq[..., 0]) / r[..., 0])
    cos = (dot * (1.0 + rsq[..., 0]) - rsq[..., 0] * (1.0 + rsq[..., 1])) / (
        r[..., 0] * dist * jnp.sqrt(1.0 + rsq[..., 0] * rsq[..., 1] - 2.0 * dot)
        + 1e-22)
    rot = jnp.arccos(jnp.clip(cos, -1.0, 1.0))
    return jnp.minimum(ap - rot, 0.0)


if __name__ == "__main__":
    key = jax.random.PRNGKey(0)
    num_entity, dim = 16, 32
    eps_bound = 0.1

    angles_table, radii_raw_table, K = init_params(
        key, num_entity, dim, relative_cone_aperture_scale=1.0,
        eps_bound=eps_bound)

    # 8 edges with distinct endpoints (a self-loop makes dist == 0, where the
    # reference's guarded division is pure fp noise and not meaningful).
    k_p, k_off = jax.random.split(jax.random.fold_in(key, 1))
    parents = jax.random.randint(k_p, (8,), 0, num_entity)
    offsets = jax.random.randint(k_off, (8,), 1, num_entity)
    idxs = jnp.stack([parents, (parents + offsets) % num_entity], axis=-1)

    fwd = jax.jit(functools.partial(
        hyperbolic_cones_forward,
        cone_aperture_scale=K, eps_bound=eps_bound))
    out = jax.block_until_ready(fwd(idxs, angles_table, radii_raw_table))

    ref = _reference(idxs, angles_table, radii_raw_table, K, eps_bound)
    assert out.shape == idxs.shape[:-1], (out.shape, idxs.shape)
    assert bool(jnp.all(jnp.isfinite(out))), out
    assert jnp.allclose(out, ref, atol=2e-3, rtol=2e-3), (out, ref)
    print("KERNEL_OK")
</pallas_src>

<mosaic_0001>
module attributes {stable_mosaic.version = 11 : i64} {
  func.func @_cones_kernel(%arg0: i32, %arg1: memref<4x1x128xf32, #tpu.memory_space<vmem>>, %arg2: memref<1x128xf32, #tpu.memory_space<vmem>>) attributes {dimension_semantics = [#tpu.dimension_semantics<parallel>], iteration_bounds = array<i64: 1>, scalar_prefetch = 0 : i64, scratch_operands = 0 : i64, tpu.core_type = #tpu.core_type<tc>, window_params = [{transform_indices = @transform_0, window_bounds = array<i64: 4, 1, 128>}, {transform_indices = @transform_1, window_bounds = array<i64: 1, 128>}]} {
    %c0 = arith.constant 0 : index
    %c0_0 = arith.constant 0 : index
    %c0_1 = arith.constant 0 : index
    %0 = vector.load %arg1[%c0, %c0_0, %c0_1] : memref<4x1x128xf32, #tpu.memory_space<vmem>>, vector<1x1x128xf32>
    %1 = vector.shape_cast %0 : vector<1x1x128xf32> to vector<1x128xf32>
    %c1 = arith.constant 1 : index
    %c0_2 = arith.constant 0 : index
    %c0_3 = arith.constant 0 : index
    %2 = vector.load %arg1[%c1, %c0_2, %c0_3] : memref<4x1x128xf32, #tpu.memory_space<vmem>>, vector<1x1x128xf32>
    %3 = vector.shape_cast %2 : vector<1x1x128xf32> to vector<1x128xf32>
    %c2 = arith.constant 2 : index
    %c0_4 = arith.constant 0 : index
    %c0_5 = arith.constant 0 : index
    %4 = vector.load %arg1[%c2, %c0_4, %c0_5] : memref<4x1x128xf32, #tpu.memory_space<vmem>>, vector<1x1x128xf32>
    %5 = vector.shape_cast %4 : vector<1x1x128xf32> to vector<1x128xf32>
    %c3 = arith.constant 3 : index
    %c0_6 = arith.constant 0 : index
    %c0_7 = arith.constant 0 : index
    %6 = vector.load %arg1[%c3, %c0_6, %c0_7] : memref<4x1x128xf32, #tpu.memory_space<vmem>>, vector<1x1x128xf32>
    %7 = vector.shape_cast %6 : vector<1x1x128xf32> to vector<1x128xf32>
    %8 = arith.mulf %3, %3 : vector<1x128xf32>
    %9 = arith.mulf %5, %5 : vector<1x128xf32>
    %10 = arith.mulf %3, %5 : vector<1x128xf32>
    %11 = arith.mulf %10, %1 : vector<1x128xf32>
    %12 = arith.addf %8, %9 : vector<1x128xf32>
    %cst = arith.constant 2.000000e+00 : f32
    %13 = vector.broadcast %cst : f32 to vector<1x128xf32>
    %14 = arith.mulf %13, %11 : vector<1x128xf32>
    %15 = arith.subf %12, %14 : vector<1x128xf32>
    %cst_8 = arith.constant 0.000000e+00 : f32
    %16 = vector.broadcast %cst_8 : f32 to vector<1x128xf32>
    %17 = arith.maximumf %15, %16 : vector<1x128xf32>
    %18 = math.sqrt %17 : vector<1x128xf32>
    %19 = arith.mulf %3, %18 : vector<1x128xf32>
    %20 = arith.mulf %8, %9 : vector<1x128xf32>
    %cst_9 = arith.constant 1.000000e+00 : f32
    %21 = vector.broadcast %cst_9 : f32 to vector<1x128xf32>
    %22 = arith.addf %21, %20 : vector<1x128xf32>
    %cst_10 = arith.constant 2.000000e+00 : f32
    %23 = vector.broadcast %cst_10 : f32 to vector<1x128xf32>
    %24 = arith.mulf %23, %11 : vector<1x128xf32>
    %25 = arith.subf %22, %24 : vector<1x128xf32>
    %26 = math.sqrt %25 : vector<1x128xf32>
    %27 = arith.mulf %19, %26 : vector<1x128xf32>
    %cst_11 = arith.constant 1.000000e-22 : f32
    %28 = vector.broadcast %cst_11 : f32 to vector<1x128xf32>
    %29 = arith.addf %27, %28 : vector<1x128xf32>
    %cst_12 = arith.constant 1.000000e+00 : f32
    %30 = vector.broadcast %cst_12 : f32 to vector<1x128xf32>
    %31 = arith.addf %30, %8 : vector<1x128xf32>
    %32 = arith.mulf %11, %31 : vector<1x128xf32>
    %cst_13 = arith.constant 1.000000e+00 : f32
    %33 = vector.broadcast %cst_13 : f32 to vector<1x128xf32>
    %34 = arith.addf %33, %9 : vector<1x128xf32>
    %35 = arith.mulf %8, %34 : vector<1x128xf32>
    %36 = arith.subf %32, %35 : vector<1x128xf32>
    %37 = tpu.reciprocal %29 {approx = true} : vector<1x128xf32> -> vector<1x128xf32>
    %38 = arith.mulf %29, %37 : vector<1x128xf32>
    %cst_14 = arith.constant 2.000000e+00 : f32
    %39 = vector.broadcast %cst_14 : f32 to vector<1x128xf32>
    %40 = arith.subf %39, %38 : vector<1x128xf32>
    %41 = arith.mulf %37, %40 : vector<1x128xf32>
    %42 = arith.mulf %36, %41 : vector<1x128xf32>
    %cst_15 = arith.constant -1.000000e+00 : f32
    %cst_16 = arith.constant 1.000000e+00 : f32
    %43 = vector.broadcast %cst_15 : f32 to vector<1x128xf32>
    %44 = arith.maximumf %43, %42 : vector<1x128xf32>
    %45 = vector.broadcast %cst_16 : f32 to vector<1x128xf32>
    %46 = arith.minimumf %45, %44 : vector<1x128xf32>
    %47 = math.absf %46 : vector<1x128xf32>
    %cst_17 = arith.constant -0.0012624911 : f32
    %48 = vector.broadcast %cst_17 : f32 to vector<1x128xf32>
    %49 = arith.mulf %48, %47 : vector<1x128xf32>
    %cst_18 = arith.constant 6.670090e-03 : f32
    %50 = vector.broadcast %cst_18 : f32 to vector<1x128xf32>
    %51 = arith.addf %49, %50 : vector<1x128xf32>
    %52 = arith.mulf %51, %47 : vector<1x128xf32>
    %cst_19 = arith.constant -0.0170881264 : f32
    %53 = vector.broadcast %cst_19 : f32 to vector<1x128xf32>
    %54 = arith.addf %52, %53 : vector<1x128xf32>
    %55 = arith.mulf %54, %47 : vector<1x128xf32>
    %cst_20 = arith.constant 0.0308918804 : f32
    %56 = vector.broadcast %cst_20 : f32 to vector<1x128xf32>
    %57 = arith.addf %55, %56 : vector<1x128xf32>
    %58 = arith.mulf %57, %47 : vector<1x128xf32>
    %cst_21 = arith.constant -0.0501743034 : f32
    %59 = vector.broadcast %cst_21 : f32 to vector<1x128xf32>
    %60 = arith.addf %58, %59 : vector<1x128xf32>
    %61 = arith.mulf %60, %47 : vector<1x128xf32>
    %cst_22 = arith.constant 0.0889789909 : f32
    %62 = vector.broadcast %cst_22 : f32 to vector<1x128xf32>
    %63 = arith.addf %61, %62 : vector<1x128xf32>
    %64 = arith.mulf %63, %47 : vector<1x128xf32>
    %cst_23 = arith.constant -0.214598805 : f32
    %65 = vector.broadcast %cst_23 : f32 to vector<1x128xf32>
    %66 = arith.addf %64, %65 : vector<1x128xf32>
    %67 = arith.mulf %66, %47 : vector<1x128xf32>
    %cst_24 = arith.constant 1.57079625 : f32
    %68 = vector.broadcast %cst_24 : f32 to vector<1x128xf32>
    %69 = arith.addf %67, %68 : vector<1x128xf32>
    %cst_25 = arith.constant 1.000000e+00 : f32
    %70 = vector.broadcast %cst_25 : f32 to vector<1x128xf32>
    %71 = arith.subf %70, %47 : vector<1x128xf32>
    %cst_26 = arith.constant 0.000000e+00 : f32
    %72 = vector.broadcast %cst_26 : f32 to vector<1x128xf32>
    %73 = arith.maximumf %71, %72 : vector<1x128xf32>
    %74 = math.sqrt %73 : vector<1x128xf32>
    %75 = arith.mulf %74, %69 : vector<1x128xf32>
    %cst_27 = arith.constant 0.000000e+00 : f32
    %76 = vector.broadcast %cst_27 : f32 to vector<1x128xf32>
    %77 = arith.cmpf oge, %46, %76 : vector<1x128xf32>
    %cst_28 = arith.constant 3.14159274 : f32
    %78 = vector.broadcast %cst_28 : f32 to vector<1x128xf32>
    %79 = arith.subf %78, %75 : vector<1x128xf32>
    %80 = arith.select %77, %75, %79 : vector<1x128xi1>, vector<1x128xf32>
    %81 = arith.subf %7, %80 : vector<1x128xf32>
    %cst_29 = arith.constant 0.000000e+00 : f32
    %82 = vector.broadcast %cst_29 : f32 to vector<1x128xf32>
    %83 = arith.minimumf %81, %82 : vector<1x128xf32>
    %c0_30 = arith.constant 0 : index
    %c0_31 = arith.constant 0 : index
    %84 = vector.load %arg2[%c0_30, %c0_31] : memref<1x128xf32, #tpu.memory_space<vmem>>, vector<1x128xf32>
    tpu.vector_store %arg2[%c0_30, %c0_31], %83 {strides = array<i32>} : memref<1x128xf32, #tpu.memory_space<vmem>>, vector<1x128xf32>,
    return
  }
  func.func @transform_0(%arg0: i32) -> (i32, i32, i32) {
    %c0_i32 = arith.constant 0 : i32
    %c0_i32_0 = arith.constant 0 : i32
    %c0_i32_1 = arith.constant 0 : i32
    return %c0_i32, %arg0, %c0_i32_0 : i32, i32, i32
  }
  func.func @transform_1(%arg0: i32) -> (i32, i32) {
    %c0_i32 = arith.constant 0 : i32
    %c0_i32_0 = arith.constant 0 : i32
    return %arg0, %c0_i32 : i32, i32
  }
}

</mosaic_0001>

<llo_original>
// kernel: hyperbolic_cones_forward.1
$region0: #{hyperbolic_cones_forward.1}
  #allocation0 [shape = 'u32[]', space=smem, size = 0x4, offset = 0x4, fixed_abs, tag = 'smem constant byte address 0x4 - core index']
  #allocation1 [shape = 'u32[144,128]{1,0:T(1,128)}', space=vmem, size = 0x12000, scoped, tag = 'internal scratch']
  %s0 = inlined_call_operand.vmem [shape: f32[4,1,128], index: 0, kind: input, shape index: {}]
  %s1 = inlined_call_operand.vmem [shape: f32[1,128], index: 1, kind: output, shape index: {}]
  %s2 = sld [smem:[#allocation0]]
  $region14: #{hyperbolic_cones_forward.1} parent=0
    _
  %s4 = ssub.s32 1, %s2
  %s5 = scalar_select 0, %s4, %s2
  // Predicated region
  $region2: #{hyperbolic_cones_forward.1} parent=0 // pred_check
    _
  $region3: #{hyperbolic_cones_forward.1} parent=0 // pred_check_branch
    %7 = sbr.rel (0) target = $region5
  $region4: #{hyperbolic_cones_forward.1} parent=0 // pred_region
    _
  $region5: #{hyperbolic_cones_forward.1} parent=0 // pred_fallthru
    _
  %v8 = vld [vmem:[%s0] sm:$0x1]
  %s9 = scalar_lea.vmem %s0, 1
  %v10 = vld [vmem:[%s9] sm:$0x1]
  %s11 = scalar_lea.vmem %s0, 2
  %v12 = vld [vmem:[%s11] sm:$0x1]
  %s13 = scalar_lea.vmem %s0, 3
  %v14 = vld [vmem:[%s13] sm:$0x1]
  %v15 = vmul.f32 %v10, %v10
  %v16 = vmul.f32 %v12, %v12
  %v17 = vmul.f32 %v10, %v12
  %v18 = vmul.f32 %v17, %v8
  %v19 = vadd.f32 %v15, %v16
  %v20 = vmul.f32 %v18, 2.0
  %v21 = vsub.f32 %v19, %v20
  %v22 = vmax.f32 %v21, 0.0
  %v23 = vrsqrt.pop %v22
  %v24 = vmul.f32 %v22, %v23
  %vm25 = vcmp.eq.f32.partialorder %v22, inf
  %v26 = vsel %vm25, %v22, %v24
  %vm27 = vcmp.eq.f32.partialorder %v22, 0.0
  %v28 = vand.u32 %v22, 2147483648
  %v29 = vsel %vm27, %v28, %v26
  %v30 = vmul.f32 %v10, %v29
  %v31 = vmul.f32 %v15, %v16
  %v32 = vadd.f32 %v31, 1.0
  %v33 = vsub.f32 %v32, %v20
  %v34 = vrsqrt.pop %v33
  %v35 = vmul.f32 %v33, %v34
  %vm36 = vcmp.eq.f32.partialorder %v33, inf
  %v37 = vsel %vm36, %v33, %v35
  %vm38 = vcmp.eq.f32.partialorder %v33, 0.0
  %v39 = vand.u32 %v33, 2147483648
  %v40 = vsel %vm38, %v39, %v37
  %v41 = vmul.f32 %v30, %v40
  %v42 = vadd.f32 %v41, 1e-22
  %v43 = vadd.f32 %v15, 1.0
  %v44 = vmul.f32 %v18, %v43
  %v45 = vadd.f32 %v16, 1.0
  %v46 = vmul.f32 %v15, %v45
  %v47 = vsub.f32 %v44, %v46
  %v48 = vrcp.pop %v42
  %v49 = vmul.f32 %v42, %v48
  %v50 = vsub.f32 2.0, %v49
  %v51 = vmul.f32 %v48, %v50
  %v52 = vmul.f32 %v47, %v51
  %v53 = vmax.f32 %v52, -1.0
  %v54 = vmin.f32 %v53, 1.0
  %v55 = vand.u32 2147483647, %v54
  %v56 = vmul.f32 %v55, -0.0012624911
  %v57 = vadd.f32 %v56, 0.00667009
  %v58 = vmul.f32 %v57, %v55
  %v59 = vadd.f32 %v58, -0.017088126
  %v60 = vmul.f32 %v59, %v55
  %v61 = vadd.f32 %v60, 0.03089188
  %v62 = vmul.f32 %v61, %v55
  %v63 = vadd.f32 %v62, -0.050174303
  %v64 = vmul.f32 %v63, %v55
  %v65 = vadd.f32 %v64, 0.08897899
  %v66 = vmul.f32 %v65, %v55
  %v67 = vadd.f32 %v66, -0.2145988
  %v68 = vmul.f32 %v67, %v55
  %v69 = vadd.f32 %v68, 1.5707963
  %v70 = vsub.f32 1.0, %v55
  %v71 = vmax.f32 %v70, 0.0
  %v72 = vrsqrt.pop %v71
  %v73 = vmul.f32 %v71, %v72
  %vm74 = vcmp.eq.f32.partialorder %v71, inf
  %v75 = vsel %vm74, %v71, %v73
  %vm76 = vcmp.eq.f32.partialorder %v71, 0.0
  %v77 = vand.u32 %v71, 2147483648
  %v78 = vsel %vm76, %v77, %v75
  %v79 = vmul.f32 %v78, %v69
  %vm80 = vcmp.ge.f32.partialorder %v54, 0.0
  %v81 = vsub.f32 3.1415927, %v79
  %v82 = vsel %vm80, %v79, %v81
  %v83 = vsub.f32 %v14, %v82
  %v84 = vmin.f32 %v83, 0.0
  %85 = vst [vmem:[%s1] sm:$0x1] %v84
  // Predicated region
  $region6: #{hyperbolic_cones_forward.1} parent=0 // pred_check
    _
  $region7: #{hyperbolic_cones_forward.1} parent=0 // pred_check_branch
    %87 = sbr.rel (0) target = $region9
  $region8: #{hyperbolic_cones_forward.1} parent=0 // pred_region
    _
  $region9: #{hyperbolic_cones_forward.1} parent=0 // pred_fallthru
    _
  // Predicated region
  $region10: #{hyperbolic_cones_forward.1} parent=0 // pred_check
    _
  $region11: #{hyperbolic_cones_forward.1} parent=0 // pred_check_branch
    %89 = sbr.rel (0) target = $region13
  $region12: #{hyperbolic_cones_forward.1} parent=0 // pred_region
    _
  $region13: #{hyperbolic_cones_forward.1} parent=0 // pred_fallthru
    _

</llo_original>
